<compile_context>
chip_gen: v7x
topology: tpu7x:2x2x1
jax: 0.10.0
libtpu: 0.0.40
codegen_flags: <defaults>
</compile_context>

<pallas_src>
import math
import functools

import jax
import jax.numpy as jnp
from jax.experimental import pallas as pl
from jax.experimental.pallas import tpu as pltpu


# --------------------------------------------------------------------------
# Per-generation VMEM budget (leave ~20% headroom for Mosaic internal scratch)
# --------------------------------------------------------------------------
def _vmem_limit_bytes():
    cap = 64 << 20  # conservative fallback (v7x per-TC physical VMEM)
    try:
        cap = int(getattr(pltpu.get_tpu_info(), "vmem_capacity_bytes", cap))
    except Exception:
        pass
    return int(cap * 0.8)


_VMEM_LIMIT = _vmem_limit_bytes()
_BIG_VMEM = _VMEM_LIMIT >= (80 << 20)   # True on 128 MiB parts (v5e / v6e)


def _pick_tile(n, target, align):
    """Largest divisor of `n` that is <= target and a multiple of `align`.

    Falls back to the full dimension (always a legal block shape) when no
    aligned divisor exists or n <= target.
    """
    if n <= target:
        return n
    t = (target // align) * align
    while t >= align:
        if n % t == 0:
            return t
        t -= align
    return n


# --------------------------------------------------------------------------
# Kernel 1: fused, fully tiled projection
#   o_n = x @ W_n + b_n   for n in [0, n_out)   (W pre-transposed: (Din, Dout))
# Grid: (M/tm, Dout/tn, Din/tk); contraction axis is "arbitrary" with an f32
# accumulator in VMEM scratch (pl.when init / finalize).
# --------------------------------------------------------------------------
def _proj_kernel(*refs, n_out):
    # refs = [x, w_0..w_{n-1}, b_0..b_{n-1}, o_0..o_{n-1}, acc]
    x_ref = refs[0]
    w_refs = refs[1:1 + n_out]
    b_refs = refs[1 + n_out:1 + 2 * n_out]
    o_refs = refs[1 + 2 * n_out:1 + 3 * n_out]
    acc_ref = refs[1 + 3 * n_out]
    kk = pl.program_id(2)

    @pl.when(kk == 0)
    def _init():
        acc_ref[...] = jnp.zeros(acc_ref.shape, acc_ref.dtype)

    x = x_ref[...]                     # one HBM read of x per grid point,
    for n in range(n_out):             # shared by all n_out matmuls
        acc_ref[n] += jnp.dot(x, w_refs[n][...],
                              preferred_element_type=jnp.float32)

    @pl.when(kk == pl.num_programs(2) - 1)
    def _finalize():
        for n in range(n_out):
            o_refs[n][...] = (acc_ref[n] + b_refs[n][...]).astype(o_refs[n].dtype)


def _fused_linear(x2, weights_t, biases):
    """x2: (M, Din); weights_t: tuple of (Din, Dout); biases: tuple of (Dout,).

    Returns a tuple of n_out arrays, each (M, Dout), in x2.dtype.
    """
    M, Din = x2.shape
    Dout = weights_t[0].shape[1]
    n_out = len(weights_t)

    tm = _pick_tile(M, 1024 if _BIG_VMEM else 512, 8)
    tn = _pick_tile(Dout, 512, 128)
    tk = _pick_tile(Din, 512, 128)

    x_spec = pl.BlockSpec((tm, tk), lambda i, j, k: (i, k))
    w_spec = pl.BlockSpec((tk, tn), lambda i, j, k: (k, j))
    b_spec = pl.BlockSpec((1, tn), lambda i, j, k: (0, j))
    o_spec = pl.BlockSpec((tm, tn), lambda i, j, k: (i, j))

    kernel = functools.partial(_proj_kernel, n_out=n_out)
    return pl.pallas_call(
        kernel,
        out_shape=tuple(jax.ShapeDtypeStruct((M, Dout), x2.dtype)
                        for _ in range(n_out)),
        grid_spec=pltpu.PrefetchScalarGridSpec(
            num_scalar_prefetch=0,
            grid=(M // tm, Dout // tn, Din // tk),
            in_specs=[x_spec] + [w_spec] * n_out + [b_spec] * n_out,
            out_specs=tuple(o_spec for _ in range(n_out)),
            scratch_shapes=[pltpu.VMEM((n_out, tm, tn), jnp.float32)],
        ),
        compiler_params=pltpu.CompilerParams(
            dimension_semantics=("parallel", "parallel", "arbitrary"),
            vmem_limit_bytes=_VMEM_LIMIT),
    )(x2, *weights_t, *(b.reshape(1, Dout) for b in biases))


# --------------------------------------------------------------------------
# Kernel 2: flash-style multi-head attention, head-group grid axis
# --------------------------------------------------------------------------
def _head_group_size(n_heads, d_head):
    """Smallest #heads per group whose packed lane width is a multiple of 128
    (vreg-aligned slices, bounded per-group unroll); falls back to all heads
    (group width == full feature dim, which is always a legal block)."""
    for g in range(1, n_heads + 1):
        if n_heads % g == 0 and (g * d_head) % 128 == 0:
            return g
    return n_heads


def _flash_mha_kernel(q_ref, k_ref, v_ref, o_ref, m_ref, l_ref, acc_ref,
                      *, heads_per_group, d_head):
    ki = pl.program_id(3)

    @pl.when(ki == 0)
    def _init():
        m_ref[...] = jnp.full(m_ref.shape, -jnp.inf, m_ref.dtype)
        l_ref[...] = jnp.zeros(l_ref.shape, l_ref.dtype)
        acc_ref[...] = jnp.zeros(acc_ref.shape, acc_ref.dtype)

    q = q_ref[0]          # (tq, gw); 1/sqrt(d_head) already folded into W_q
    k = k_ref[0]          # (tk, gw)
    v = v_ref[0]          # (tk, gw)

    for h in range(heads_per_group):      # small, bounded unroll (gw-limited)
        lo = h * d_head
        hi = lo + d_head
        qh = q[:, lo:hi]                  # (tq, dh)
        kh = k[:, lo:hi]                  # (tk, dh)
        vh = v[:, lo:hi]                  # (tk, dh)
        # s = qh @ kh^T on the MXU, f32 accumulation.
        s = jax.lax.dot_general(qh, kh, (((1,), (1,)), ((), ())),
                                preferred_element_type=jnp.float32)  # (tq, tk)
        m_prev = m_ref[h]                                            # (tq, 1)
        m_new = jnp.maximum(m_prev, jnp.max(s, axis=-1, keepdims=True))
        alpha = jnp.exp(m_prev - m_new)
        p = jnp.exp(s - m_new)                                       # (tq, tk)
        l_ref[h] = alpha * l_ref[h] + jnp.sum(p, axis=-1, keepdims=True)
        acc_ref[h] = alpha * acc_ref[h] + jnp.dot(
            p.astype(vh.dtype), vh, preferred_element_type=jnp.float32)
        m_ref[h] = m_new

    @pl.when(ki == pl.num_programs(3) - 1)
    def _finalize():
        # Direct per-head slab stores into the lane-dense output block — no
        # jnp.concatenate, no giant (tq, D) live value in vregs.
        for h in range(heads_per_group):
            lo = h * d_head
            inv = pl.reciprocal(l_ref[h], approx=True)   # EUP slot, ~free
            o_ref[0, :, lo:lo + d_head] = (acc_ref[h] * inv).astype(o_ref.dtype)


def _flash_attention(q, k, v, n_heads):
    """q: (B, Tq, D), k/v: (B, Tk, D), heads packed on lanes. -> (B, Tq, D)."""
    B, Tq, D = q.shape
    Tk = k.shape[1]
    dh = D // n_heads
    g = _head_group_size(n_heads, dh)
    gw = g * dh
    n_groups = n_heads // g

    tq = _pick_tile(Tq, 512 if _BIG_VMEM else 256, 8)
    tk = _pick_tile(Tk, 512 if _BIG_VMEM else 256, 8)

    kernel = functools.partial(_flash_mha_kernel,
                               heads_per_group=g, d_head=dh)
    return pl.pallas_call(
        kernel,
        out_shape=jax.ShapeDtypeStruct((B, Tq, D), q.dtype),
        grid_spec=pltpu.PrefetchScalarGridSpec(
            num_scalar_prefetch=0,
            grid=(B, n_groups, Tq // tq, Tk // tk),
            in_specs=[
                pl.BlockSpec((1, tq, gw), lambda b, hg, qi, ki: (b, qi, hg)),
                pl.BlockSpec((1, tk, gw), lambda b, hg, qi, ki: (b, ki, hg)),
                pl.BlockSpec((1, tk, gw), lambda b, hg, qi, ki: (b, ki, hg)),
            ],
            out_specs=pl.BlockSpec((1, tq, gw),
                                   lambda b, hg, qi, ki: (b, qi, hg)),
            scratch_shapes=[
                pltpu.VMEM((g, tq, 1), jnp.float32),    # running max
                pltpu.VMEM((g, tq, 1), jnp.float32),    # running sum
                pltpu.VMEM((g, tq, dh), jnp.float32),   # output accumulator
            ],
        ),
        compiler_params=pltpu.CompilerParams(
            dimension_semantics=("parallel", "parallel", "parallel",
                                 "arbitrary"),
            vmem_limit_bytes=_VMEM_LIMIT),
    )(q, k, v)


# --------------------------------------------------------------------------
# MultiheadAttention forward (mirrors the PyTorch module, eval mode)
# --------------------------------------------------------------------------
def multihead_attention_forward(params, x_q, x_kv, n_heads):
    B, Tq, Din = x_q.shape
    Tk = x_kv.shape[1]
    dqkv = params["W_q_w"].shape[0]
    dh = dqkv // n_heads
    dtype = x_q.dtype

    # Pre-transpose weights (lane-contiguous x @ W, no in-kernel transpose)
    # and fold the 1/sqrt(d_head) softmax scale into W_q / b_q once.
    scale = 1.0 / math.sqrt(dh)
    w_q_t = (params["W_q_w"].T * scale).astype(dtype)
    b_q = (params["W_q_b"] * scale).astype(dtype)
    w_k_t = params["W_k_w"].T.astype(dtype)
    b_k = params["W_k_b"].astype(dtype)
    w_v_t = params["W_v_w"].T.astype(dtype)
    b_v = params["W_v_b"].astype(dtype)

    if x_q is x_kv:
        # Self-attention: one fused Q/K/V projection (x read from HBM once).
        q2, k2, v2 = _fused_linear(x_q.reshape(B * Tq, Din),
                                   (w_q_t, w_k_t, w_v_t), (b_q, b_k, b_v))
    else:
        # Cross-attention: Q separately, K/V fused.
        (q2,) = _fused_linear(x_q.reshape(B * Tq, Din), (w_q_t,), (b_q,))
        k2, v2 = _fused_linear(x_kv.reshape(B * Tk, Din),
                               (w_k_t, w_v_t), (b_k, b_v))

    q = q2.reshape(B, Tq, dqkv)
    k = k2.reshape(B, Tk, dqkv)
    v = v2.reshape(B, Tk, dqkv)

    # Heads stay packed on the lane axis: no host-side head transposes.
    ctx = _flash_attention(q, k, v, n_heads)                 # (B, Tq, dqkv)

    if params.get("W_out_w") is not None:
        (out2,) = _fused_linear(ctx.reshape(B * Tq, dqkv),
                                (params["W_out_w"].T.astype(dtype),),
                                (params["W_out_b"].astype(dtype),))
        return out2.reshape(B, Tq, -1)
    return ctx


# --------------------------------------------------------------------------
# Deterministic parameter init (xavier_uniform gain=1/sqrt(2), zero biases)
# --------------------------------------------------------------------------
def init_params(key, input_dim, n_heads, qkv_dim=None):
    qkv_dim = input_dim if qkv_dim is None else qkv_dim
    k_q, k_k, k_v, k_o = jax.random.split(key, 4)

    def xavier(k, out_d, in_d, gain):
        bound = gain * math.sqrt(6.0 / (in_d + out_d))
        return jax.random.uniform(k, (out_d, in_d), jnp.float32, -bound, bound)

    gain = 1.0 / math.sqrt(2.0)
    params = {
        "W_q_w": xavier(k_q, qkv_dim, input_dim, gain),
        "W_q_b": jnp.zeros((qkv_dim,), jnp.float32),
        "W_k_w": xavier(k_k, qkv_dim, input_dim, gain),
        "W_k_b": jnp.zeros((qkv_dim,), jnp.float32),
        "W_v_w": xavier(k_v, qkv_dim, input_dim, gain),
        "W_v_b": jnp.zeros((qkv_dim,), jnp.float32),
        "W_out_w": None,
        "W_out_b": None,
    }
    if qkv_dim != input_dim or n_heads > 1:
        bound = 1.0 / math.sqrt(qkv_dim)
        params["W_out_w"] = jax.random.uniform(
            k_o, (input_dim, qkv_dim), jnp.float32, -bound, bound)
        params["W_out_b"] = jnp.zeros((input_dim,), jnp.float32)
    return params


# --------------------------------------------------------------------------
# Pure-JAX reference (mirrors the PyTorch forward) for a sanity check
# --------------------------------------------------------------------------
def _split_heads(x, n_heads):
    B, T, D = x.shape
    dh = D // n_heads
    return x.reshape(B, T, n_heads, dh).transpose(0, 2, 1, 3).reshape(
        B * n_heads, T, dh)


def _reference(params, x_q, x_kv, n_heads):
    q = x_q @ params["W_q_w"].T + params["W_q_b"]
    k = x_kv @ params["W_k_w"].T + params["W_k_b"]
    v = x_kv @ params["W_v_w"].T + params["W_v_b"]
    B, Tq, _ = q.shape
    dh = k.shape[-1] // n_heads
    qh = _split_heads(q, n_heads)
    kh = _split_heads(k, n_heads)
    vh = _split_heads(v, n_heads)
    s = jnp.einsum("bqd,bkd->bqk", qh, kh) / math.sqrt(dh)
    p = jax.nn.softmax(s, axis=-1)
    xh = jnp.einsum("bqk,bkd->bqd", p, vh)
    x = xh.reshape(B, n_heads, Tq, dh).transpose(0, 2, 1, 3).reshape(B, Tq, -1)
    if params.get("W_out_w") is not None:
        x = x @ params["W_out_w"].T + params["W_out_b"]
    return x


if __name__ == "__main__":
    key = jax.random.PRNGKey(0)
    k_par, k_q, k_kv = jax.random.split(key, 3)

    batch, n_tokens, input_dim, n_heads = 2, 8, 32, 4

    params = init_params(k_par, input_dim, n_heads)
    x_q = jax.random.normal(k_q, (batch, n_tokens, input_dim), jnp.float32)
    x_kv = jax.random.normal(k_kv, (batch, n_tokens, input_dim), jnp.float32)

    # Cross-attention path (separate Q projection, fused K/V projection).
    out = jax.block_until_ready(
        multihead_attention_forward(params, x_q, x_kv, n_heads))
    ref = _reference(params, x_q, x_kv, n_heads)
    assert out.shape == (batch, n_tokens, input_dim)
    # approx=True reciprocal in the softmax denominator -> slightly looser tol
    assert jnp.max(jnp.abs(out - ref)) < 2e-3, "cross-attention mismatch"

    # Self-attention path (single fused Q/K/V projection).
    out_self = jax.block_until_ready(
        multihead_attention_forward(params, x_q, x_q, n_heads))
    ref_self = _reference(params, x_q, x_q, n_heads)
    assert jnp.max(jnp.abs(out_self - ref_self)) < 2e-3, "self-attn mismatch"

    # bf16 activations/weights with f32 accumulation (smoke test).
    out_bf16 = jax.block_until_ready(
        multihead_attention_forward(params, x_q.astype(jnp.bfloat16),
                                    x_kv.astype(jnp.bfloat16), n_heads))
    assert out_bf16.shape == (batch, n_tokens, input_dim)
    assert out_bf16.dtype == jnp.bfloat16
    assert bool(jnp.all(jnp.isfinite(out_bf16.astype(jnp.float32))))

    print("KERNEL_OK")
</pallas_src>

<mosaic_0001>
module attributes {stable_mosaic.version = 11 : i64} {
  func.func @_proj_kernel(%arg0: i32, %arg1: i32, %arg2: i32, %arg3: memref<16x32xf32, #tpu.memory_space<vmem>>, %arg4: memref<32x32xf32, #tpu.memory_space<vmem>>, %arg5: memref<1x32xf32, #tpu.memory_space<vmem>>, %arg6: memref<16x32xf32, #tpu.memory_space<vmem>>, %arg7: memref<1x16x32xf32, #tpu.memory_space<vmem>>) attributes {dimension_semantics = [#tpu.dimension_semantics<parallel>, #tpu.dimension_semantics<parallel>, #tpu.dimension_semantics<arbitrary>], iteration_bounds = array<i64: 1, 1, 1>, scalar_prefetch = 0 : i64, scratch_operands = 1 : i64, tpu.core_type = #tpu.core_type<tc>, window_params = [{transform_indices = @transform_0, window_bounds = array<i64: 16, 32>}, {transform_indices = @transform_1, window_bounds = array<i64: 32, 32>}, {transform_indices = @transform_2, window_bounds = array<i64: 1, 32>}, {transform_indices = @transform_3, window_bounds = array<i64: 16, 32>}]} {
    %c0_i32 = arith.constant 0 : i32
    %0 = arith.cmpi eq, %arg2, %c0_i32 : i32
    %1 = arith.extui %0 : i1 to i32
    %c0_i32_0 = arith.constant 0 : i32
    %2 = arith.cmpi ne, %1, %c0_i32_0 : i32
    scf.if %2 {
      %cst_12 = arith.constant 0.000000e+00 : f32
      %15 = vector.broadcast %cst_12 : f32 to vector<1x16x32xf32>
      %c0_13 = arith.constant 0 : index
      %c0_14 = arith.constant 0 : index
      %c0_15 = arith.constant 0 : index
      %16 = vector.load %arg7[%c0_13, %c0_14, %c0_15] : memref<1x16x32xf32, #tpu.memory_space<vmem>>, vector<1x16x32xf32>
      tpu.vector_store %arg7[%c0_13, %c0_14, %c0_15], %15 {strides = array<i32>} : memref<1x16x32xf32, #tpu.memory_space<vmem>>, vector<1x16x32xf32>,
    } else {
    }
    %c0 = arith.constant 0 : index
    %c0_1 = arith.constant 0 : index
    %3 = vector.load %arg3[%c0, %c0_1] : memref<16x32xf32, #tpu.memory_space<vmem>>, vector<16x32xf32>
    %c0_2 = arith.constant 0 : index
    %c0_3 = arith.constant 0 : index
    %c0_4 = arith.constant 0 : index
    %4 = vector.load %arg7[%c0_2, %c0_3, %c0_4] : memref<1x16x32xf32, #tpu.memory_space<vmem>>, vector<1x16x32xf32>
    %5 = vector.shape_cast %4 : vector<1x16x32xf32> to vector<16x32xf32>
    %c0_5 = arith.constant 0 : index
    %c0_6 = arith.constant 0 : index
    %6 = vector.load %arg4[%c0_5, %c0_6] : memref<32x32xf32, #tpu.memory_space<vmem>>, vector<32x32xf32>
    %cst = arith.constant dense<0.000000e+00> : vector<16x32xf32>
    %7 = tpu.matmul %3, %6, %cst {dimension_numbers = #tpu.dot_dimension_numbers<[1], [0], [0], [1], [0, 0, 1, 1], [], []>} : vector<16x32xf32>, vector<32x32xf32>, vector<16x32xf32> -> vector<16x32xf32>
    %8 = arith.addf %5, %7 : vector<16x32xf32>
    %c0_7 = arith.constant 0 : index
    %c0_8 = arith.constant 0 : index
    %c0_9 = arith.constant 0 : index
    %9 = vector.load %arg7[%c0_7, %c0_8, %c0_9] : memref<1x16x32xf32, #tpu.memory_space<vmem>>, vector<1x16x32xf32>
    %10 = vector.shape_cast %9 : vector<1x16x32xf32> to vector<16x32xf32>
    %11 = vector.shape_cast %8 : vector<16x32xf32> to vector<1x16x32xf32>
    tpu.vector_store %arg7[%c0_7, %c0_8, %c0_9], %11 {strides = array<i32>} : memref<1x16x32xf32, #tpu.memory_space<vmem>>, vector<1x16x32xf32>,
    %c0_i32_10 = arith.constant 0 : i32
    %12 = arith.cmpi eq, %arg2, %c0_i32_10 : i32
    %13 = arith.extui %12 : i1 to i32
    %c0_i32_11 = arith.constant 0 : i32
    %14 = arith.cmpi ne, %13, %c0_i32_11 : i32
    scf.if %14 {
      %c0_12 = arith.constant 0 : index
      %c0_13 = arith.constant 0 : index
      %c0_14 = arith.constant 0 : index
      %15 = vector.load %arg7[%c0_12, %c0_13, %c0_14] : memref<1x16x32xf32, #tpu.memory_space<vmem>>, vector<1x16x32xf32>
      %16 = vector.shape_cast %15 : vector<1x16x32xf32> to vector<16x32xf32>
      %c0_15 = arith.constant 0 : index
      %c0_16 = arith.constant 0 : index
      %17 = vector.load %arg5[%c0_15, %c0_16] : memref<1x32xf32, #tpu.memory_space<vmem>>, vector<1x32xf32>
      %18 = vector.broadcast %17 : vector<1x32xf32> to vector<16x32xf32>
      %19 = arith.addf %16, %18 : vector<16x32xf32>
      %c0_17 = arith.constant 0 : index
      %c0_18 = arith.constant 0 : index
      %20 = vector.load %arg6[%c0_17, %c0_18] : memref<16x32xf32, #tpu.memory_space<vmem>>, vector<16x32xf32>
      tpu.vector_store %arg6[%c0_17, %c0_18], %19 {strides = array<i32>} : memref<16x32xf32, #tpu.memory_space<vmem>>, vector<16x32xf32>,
    } else {
    }
    return
  }
  func.func @transform_0(%arg0: i32, %arg1: i32, %arg2: i32) -> (i32, i32) {
    %c0_i32 = arith.constant 0 : i32
    return %arg0, %arg2 : i32, i32
  }
  func.func @transform_1(%arg0: i32, %arg1: i32, %arg2: i32) -> (i32, i32) {
    %c0_i32 = arith.constant 0 : i32
    return %arg2, %arg1 : i32, i32
  }
  func.func @transform_2(%arg0: i32, %arg1: i32, %arg2: i32) -> (i32, i32) {
    %c0_i32 = arith.constant 0 : i32
    %c0_i32_0 = arith.constant 0 : i32
    return %c0_i32, %arg1 : i32, i32
  }
  func.func @transform_3(%arg0: i32, %arg1: i32, %arg2: i32) -> (i32, i32) {
    %c0_i32 = arith.constant 0 : i32
    return %arg0, %arg1 : i32, i32
  }
}

</mosaic_0001>

<llo_original>
// kernel: tpu_custom_call.1
$region0: #{tpu_custom_call.1}
  #allocation0 [shape = 'u32[]', space=smem, size = 0x4, offset = 0x4, fixed_abs, tag = 'smem constant byte address 0x4 - core index']
  #allocation1 [shape = 'u32[144,128]{1,0:T(1,128)}', space=vmem, size = 0x12000, scoped, tag = 'internal scratch']
  #allocation2 [shape = 'f32[1,16,32]{2,1,0:T(8,128)}', space=vmem, size = 0x2000, scoped, tag = 'scratch operand']
  %s0 = inlined_call_operand.hbm [shape: f32[16,32], index: 0, kind: input, shape index: {}]
  %s1 = inlined_call_operand.hbm [shape: f32[32,32], index: 1, kind: input, shape index: {}]
  %s2 = inlined_call_operand.vmem [shape: f32[1,32], index: 2, kind: input, shape index: {}]
  %s3 = inlined_call_operand.hbm [shape: f32[16,32], index: 3, kind: output, shape index: {}]
  %s4 = sld [smem:[#allocation0]]
  $region38: #{tpu_custom_call.1} parent=0
    _
  %s6 = ssub.s32 1, %s4
  %s7 = scalar_select 0, %s6, %s4
  $region1: #{tpu_custom_call.1} parent=0
    #allocation3 [shape = 'u8[8192]{0}', space=vmem, size = 0x2000, scoped, tag = 'input window, operand 0, single buffered']
    #allocation4 [shape = 's32[1]{0}', space=sflag, size = 0x4, scoped, tag = 'scoped memory for tpu_custom_call.1']
    #allocation5 [shape = 's32[1]{0}', space=sflag, size = 0x4, scoped, tag = 'scoped memory for tpu_custom_call.1']
    #allocation6 [shape = 'u8[16384]{0}', space=vmem, size = 0x4000, scoped, tag = 'input window, operand 1, single buffered']
    #allocation7 [shape = 's32[1]{0}', space=sflag, size = 0x4, scoped, tag = 'scoped memory for tpu_custom_call.1']
    #allocation8 [shape = 'u8[8192]{0}', space=vmem, size = 0x2000, scoped, tag = 'output window, operand 0, single buffered']
    %8 = vsyncpa [#allocation4], 0
    %9 = vsyncpa [#allocation7], 0
    %10 = vsyncpa [#allocation5], 0
    // Predicated region
    $region2: #{tpu_custom_call.1} parent=1 // pred_check
      _
    $region3: #{tpu_custom_call.1} parent=1 // pred_check_branch
      %12 = sbr.rel (0) target = $region5
    $region4: #{tpu_custom_call.1} parent=1 // pred_region
      %s14 = ssub.s32 256, 256
      %15 = vsyncadd [#allocation4], %s14
      %s16 = sshll.u32 [#allocation3], 4
      %s17 = int_to_ptr.vmem [resolvable:$true] %s16
      %22 = dma.hbm_to_vmem [thread:$0]  %s0, 256, %s17, [#allocation4], 128, 128, 8
    $region5: #{tpu_custom_call.1} parent=1 // pred_fallthru
      _
    // Predicated region
    $region6: #{tpu_custom_call.1} parent=1 // pred_check
      _
    $region7: #{tpu_custom_call.1} parent=1 // pred_check_branch
      %24 = sbr.rel (0) target = $region9
    $region8: #{tpu_custom_call.1} parent=1 // pred_region
      %s26 = ssub.s32 512, 512
      %27 = vsyncadd [#allocation7], %s26
      %s28 = sshll.u32 [#allocation6], 4
      %s29 = int_to_ptr.vmem [resolvable:$true] %s28
      %34 = dma.hbm_to_vmem [thread:$0]  %s1, 512, %s29, [#allocation7], 128, 128, 8
    $region9: #{tpu_custom_call.1} parent=1 // pred_fallthru
      _
    // Predicated region
    $region10: #{tpu_custom_call.1} parent=1 // pred_check
      _
    $region11: #{tpu_custom_call.1} parent=1 // pred_check_branch
      %36 = sbr.rel (0) target = $region13
    $region12: #{tpu_custom_call.1} parent=1 // pred_region
      _
    $region13: #{tpu_custom_call.1} parent=1 // pred_fallthru
      _
    // Predicated region
    $region14: #{tpu_custom_call.1} parent=1 // pred_check
      _
    $region15: #{tpu_custom_call.1} parent=1 // pred_check_branch
      %38 = sbr.rel (0) target = $region17
    $region16: #{tpu_custom_call.1} parent=1 // pred_region
      %39 = dma.done [#allocation4], 256
    $region17: #{tpu_custom_call.1} parent=1 // pred_fallthru
      _
    // Predicated region
    $region18: #{tpu_custom_call.1} parent=1 // pred_check
      _
    $region19: #{tpu_custom_call.1} parent=1 // pred_check_branch
      %41 = sbr.rel (0) target = $region21
    $region20: #{tpu_custom_call.1} parent=1 // pred_region
      %42 = dma.done [#allocation7], 512
    $region21: #{tpu_custom_call.1} parent=1 // pred_fallthru
      _
    %p43 = scmp.eq.s32.totalorder 0, 0
    // Predicated region
    $region22: #{tpu_custom_call.1} parent=1 // pred_check
      %p44 = pneg %p43
    $region23: #{tpu_custom_call.1} parent=1 // pred_check_branch
      %46 = sbr.rel (%p44) target = $region25
    $region24: #{tpu_custom_call.1} parent=1 // pred_region
      %vm47 = vcmask 261120
      %48 = vst.msk [vmem:[#allocation2] sm:$0xff] %vm47, 0.0
      %49 = vst.msk [vmem:[#allocation2 + $0x8] sm:$0xff] %vm47, 0.0
    $region25: #{tpu_custom_call.1} parent=1 // pred_fallthru
      _
    %v50 = vld [vmem:[#allocation3] sm:$0xff]
    %v51 = vld [vmem:[#allocation3 + $0x8] sm:$0xff]
    %v52 = vld [vmem:[#allocation2] sm:$0xff]
    %v53 = vld [vmem:[#allocation2 + $0x8] sm:$0xff]
    %v54 = vld [vmem:[#allocation6] sm:$0xff]
    %v55 = vld [vmem:[#allocation6 + $0x8] sm:$0xff]
    %v56 = vld [vmem:[#allocation6 + $0x10] sm:$0xff]
    %v57 = vld [vmem:[#allocation6 + $0x18] sm:$0xff]
    %vm58 = vcmask 261120
    %v60 = vsel %vm58, %v50, 0
    %v63 = vsel %vm58, %v51, 0
    %65 = vmatprep.subr.mxu0 0.0
    %66 = vmatpush1.msra.mxu0 %v54
    %67 = vmatprep.subr.mxu0 0.0
    %68 = vmatpush1.msra.mxu0 %v55
    %69 = vmatprep.subr.mxu0 0.0
    %70 = vmatpush1.msra.mxu0 %v56
    %71 = vmatprep.subr.mxu0 0.0
    %72 = vmatpush1.msra.mxu0 %v57
    %73 = vmatprep.subr.mxu0 0.0
    %74 = vmatpush1.msra.mxu0 0.0
    %75 = vmatprep.subr.mxu0 0.0
    %76 = vmatpush1.msra.mxu0 0.0
    %77 = vmatprep.subr.mxu0 0.0
    %78 = vmatpush1.msra.mxu0 0.0
    %79 = vmatprep.subr.mxu0 0.0
    %80 = vmatpush1.msra.mxu0 0.0
    %81 = vmatprep.subr.mxu0 0.0
    %82 = vmatpush1.msra.mxu0 0.0
    %83 = vmatprep.subr.mxu0 0.0
    %84 = vmatpush1.msra.mxu0 0.0
    %85 = vmatprep.subr.mxu0 0.0
    %86 = vmatpush1.msra.mxu0 0.0
    %87 = vmatprep.subr.mxu0 0.0
    %88 = vmatpush1.msra.mxu0 0.0
    %89 = vmatprep.subr.mxu0 0.0
    %90 = vmatpush1.msra.mxu0 0.0
    %91 = vmatprep.subr.mxu0 0.0
    %92 = vmatpush1.msra.mxu0 0.0
    %93 = vmatprep.subr.mxu0 0.0
    %94 = vmatpush1.msra.mxu0 0.0
    %95 = vmatprep.subr.mxu0 0.0
    %96 = vmatpush1.msra.mxu0 0.0
    %97 = vmatprep.subr.mxu0 0.0
    %98 = vmatpush1.msra.mxu0 0.0
    %99 = vmatprep.subr.mxu0 0.0
    %100 = vmatpush1.msra.mxu0 0.0
    %101 = vmatprep.subr.mxu0 0.0
    %102 = vmatpush1.msra.mxu0 0.0
    %103 = vmatprep.subr.mxu0 0.0
    %104 = vmatpush1.msra.mxu0 0.0
    %105 = vmatprep.subr.mxu0 0.0
    %106 = vmatpush1.msra.mxu0 0.0
    %107 = vmatprep.subr.mxu0 0.0
    %108 = vmatpush1.msra.mxu0 0.0
    %109 = vmatprep.subr.mxu0 0.0
    %110 = vmatpush1.msra.mxu0 0.0
    %111 = vmatprep.subr.mxu0 0.0
    %112 = vmatpush1.msra.mxu0 0.0
    %113 = vmatprep.subr.mxu0 0.0
    %114 = vmatpush1.msra.mxu0 0.0
    %115 = vmatprep.subr.mxu0 0.0
    %116 = vmatpush1.msra.mxu0 0.0
    %117 = vmatprep.subr.mxu0 0.0
    %118 = vmatpush1.msra.mxu0 0.0
    %119 = vmatprep.subr.mxu0 0.0
    %120 = vmatpush1.msra.mxu0 0.0
    %121 = vmatprep.subr.mxu0 0.0
    %122 = vmatpush1.msra.mxu0 0.0
    %123 = vmatprep.subr.mxu0 0.0
    %124 = vmatpush1.msra.mxu0 0.0
    %125 = vmatprep.subr.mxu0 0.0
    %126 = vmatpush1.msra.mxu0 0.0
    %127 = vmatprep.subr.mxu0 0.0
    %128 = vmatpush1.msra.mxu0 0.0
    %129 = vmatprep.mubr.f32.mxu0 0.0
    %130 = vmatmul.mubr.f32.gmra.mrb[0].mxu0 %v60
    %v131 = vpop.f32.mrb[0].mxu0
    %v132 = vadd.f32 0.0, %v131
    %v133 = vpop.f32.mrb[0].mxu0
    %134 = vmatprep.mubr.f32.mxu0 0.0
    %135 = vmatmul.mubr.f32.gmra.mrb[0].mxu0 %v63
    %v136 = vpop.f32.mrb[0].mxu0
    %v137 = vadd.f32 0.0, %v136
    %v138 = vpop.f32.mrb[0].mxu0
    %139 = vdwg.mxu0
    %v140 = vadd.f32 %v52, %v132
    %v141 = vadd.f32 %v53, %v137
    %142 = vst.msk [vmem:[#allocation2] sm:$0xff] %vm58, %v140
    %143 = vst.msk [vmem:[#allocation2 + $0x8] sm:$0xff] %vm58, %v141
    // Predicated region
    $region26: #{tpu_custom_call.1} parent=1 // pred_check
      %p144 = pneg %p43
    $region27: #{tpu_custom_call.1} parent=1 // pred_check_branch
      %146 = sbr.rel (%p144) target = $region29
    $region28: #{tpu_custom_call.1} parent=1 // pred_region
      %v147 = vld [vmem:[#allocation2] sm:$0xff]
      %v148 = vld [vmem:[#allocation2 + $0x8] sm:$0xff]
      %v149 = vld [vmem:[%s2] sm:$0x1]
      %v151 = vlaneseq
      %v152 = vshrl.u32 %v151, 7
      %v153 = vsub.s32 0, %v152
      %v154 = vrot.slane %v149, %v153
      %v156 = vadd.f32 %v147, %v154
      %v157 = vadd.f32 %v148, %v154
      %158 = vst.msk [vmem:[#allocation8] sm:$0xff] %vm58, %v156
      %159 = vst.msk [vmem:[#allocation8 + $0x8] sm:$0xff] %vm58, %v157
    $region29: #{tpu_custom_call.1} parent=1 // pred_fallthru
      _
    // Predicated region
    $region30: #{tpu_custom_call.1} parent=1 // pred_check
      _
    $region31: #{tpu_custom_call.1} parent=1 // pred_check_branch
      %161 = sbr.rel (0) target = $region33
    $region32: #{tpu_custom_call.1} parent=1 // pred_region
      %s163 = ssub.s32 256, 256
      %164 = vsyncadd [#allocation5], %s163
      %s165 = sshll.u32 [#allocation8], 4
      %s166 = int_to_ptr.vmem [resolvable:$true] %s165
      %171 = dma.vmem_to_hbm [thread:$0]  %s166, 256, %s3, [#allocation5], 128, 128, 8
    $region33: #{tpu_custom_call.1} parent=1 // pred_fallthru
      _
    // Predicated region
    $region34: #{tpu_custom_call.1} parent=1 // pred_check
      _
    $region35: #{tpu_custom_call.1} parent=1 // pred_check_branch
      %173 = sbr.rel (0) target = $region37
    $region36: #{tpu_custom_call.1} parent=1 // pred_region
      %174 = dma.done [#allocation5], 256
    $region37: #{tpu_custom_call.1} parent=1 // pred_fallthru
      _
    %175 = vsyncpa [#allocation4], 1
    %176 = vsyncpa [#allocation7], 1
    %177 = vsyncpa [#allocation5], 1

</llo_original>
